<compile_context>
chip_gen: v5e
topology: v5e:2x2
jax: 0.10.0
libtpu: 0.0.40
codegen_flags: <defaults>
</compile_context>

<pallas_src>
import jax
import jax.numpy as jnp
from jax.experimental import pallas as pl
from jax.experimental.pallas import tpu as pltpu

VOCAB = 100           # nn.Embedding(100, n_atom_basis)
VOCAB_PAD = 128       # vocab rows padded to a lane-aligned 128 (do NOT raise to 256:
                      # the matmul is nowhere near the bottleneck)
LANE = 128
SUBLANE = 8
DEFAULT_TM = 2048     # atom-tile cap (rows); large tiles amortize ~0.35us/step overhead
MIN_SPLIT_TM = 256    # only force a >=2-way grid split if each half is at least this big


def _round_up(x, m):
    return ((x + m - 1) // m) * m


def _vmem_budget_bytes():
    """Per-generation VMEM budget: half of physical capacity, capped at 64 MiB.

    v5e/v6e: 128 MiB physical -> 64 MiB budget; v7x: 64 MiB physical -> 32 MiB budget.
    Passed explicitly as vmem_limit_bytes so v5e's 16 MiB scoped default never bites.
    """
    try:
        cap = int(pltpu.get_tpu_info().vmem_capacity_bytes)
    except Exception:
        cap = 64 * 1024 * 1024  # conservative fallback (v7x-sized)
    return min(cap // 2, 64 * 1024 * 1024)


def _embed_kernel(z_ref, table_ref, out_ref):
    """Gather embedding rows for a tile of atoms via a one-hot MXU matmul.

    z_ref:     (TM, 1)            int32  atomic numbers for this atom tile
    table_ref: (VOCAB_PAD, F)     f32    padded embedding table (whole array, VMEM-resident)
    out_ref:   (TM, F)            f32    gathered embeddings
    """
    z = z_ref[...]                                                       # (TM, 1)
    vocab_ids = jax.lax.broadcasted_iota(jnp.int32, (1, table_ref.shape[0]), 1)
    one_hot = (z == vocab_ids).astype(table_ref.dtype)                   # (TM, VOCAB_PAD)
    out_ref[...] = jnp.dot(
        one_hot, table_ref[...], preferred_element_type=jnp.float32
    ).astype(out_ref.dtype)


def pallas_embedding_lookup(atomic_numbers, table_padded, *, tm_cap=DEFAULT_TM,
                            out_dtype=None):
    """x = table[atomic_numbers]  (nn.Embedding forward).

    NOTE: atomic numbers outside [0, VOCAB) silently gather all-zero rows
    (nn.Embedding(100, ...) would raise); padding atoms use Z=0 and are sliced
    off before return.
    """
    n_atoms = int(atomic_numbers.shape[0])
    vocab_pad, n_basis = table_padded.shape
    out_dtype = table_padded.dtype if out_dtype is None else out_dtype

    # Atom dim padded only to a multiple of 8 (never to a multiple of the tile).
    n_pad8 = _round_up(max(n_atoms, 1), SUBLANE)

    budget = _vmem_budget_bytes()
    table_bytes = vocab_pad * n_basis * jnp.dtype(table_padded.dtype).itemsize
    out_row_bytes = n_basis * jnp.dtype(out_dtype).itemsize
    # Per atom-row VMEM while pipelining: double-buffered output tile + double-buffered Z tile.
    per_row = 2 * out_row_bytes + 2 * 4
    avail = max(int(budget * 0.9) - table_bytes, SUBLANE * per_row)
    tm_eff = max(SUBLANE,
                 min(tm_cap, (avail // per_row) // SUBLANE * SUBLANE, n_pad8))
    # Keep >= 2 grid tiles for big inputs so v7x's two TensorCores both get work.
    if n_pad8 >= 2 * MIN_SPLIT_TM:
        tm_eff = min(tm_eff, _round_up((n_pad8 + 1) // 2, SUBLANE))
    # TODO(synk): benchmark pltpu.CORE_PARALLEL for the grid axis on v7x.

    if n_pad8 == n_atoms:
        z = atomic_numbers.astype(jnp.int32).reshape(n_atoms, 1)
    else:
        z = (
            jnp.zeros((n_pad8, 1), jnp.int32)
            .at[:n_atoms, 0]
            .set(atomic_numbers.astype(jnp.int32))
        )

    out = pl.pallas_call(
        _embed_kernel,
        out_shape=jax.ShapeDtypeStruct((n_pad8, n_basis), out_dtype),
        grid_spec=pltpu.PrefetchScalarGridSpec(
            num_scalar_prefetch=0,
            grid=(pl.cdiv(n_pad8, tm_eff),),           # ragged last block handled by Pallas
            in_specs=[
                pl.BlockSpec((tm_eff, 1), lambda i: (i, 0)),          # atom tile of Z
                # Whole table as a single VMEM-resident operand: copied once,
                # no double-buffering of a constant-index block.
                pl.BlockSpec(memory_space=pltpu.MemorySpace.VMEM),
            ],
            out_specs=pl.BlockSpec((tm_eff, n_basis), lambda i: (i, 0)),
        ),
        compiler_params=pltpu.CompilerParams(
            # Independent atom tiles -> parallel grid axis.
            dimension_semantics=("parallel",),
            vmem_limit_bytes=int(budget),
        ),
    )(z, table_padded)

    # Drop atom-padding rows only when padding exists (feature dim is never padded).
    return out if n_pad8 == n_atoms else out[:n_atoms]


class AtomisticRepresentation:
    """JAX/Pallas port of schnetpack's AtomisticRepresentation base class."""

    def __init__(self, n_atom_basis, n_interactions,
                 radial_basis=None, cutoff_fn=None, activation=jax.nn.silu,
                 nuclear_embedding=None, electronic_embeddings=None):
        self.n_atom_basis = n_atom_basis
        self.n_interactions = n_interactions
        self.radial_basis = radial_basis
        self.cutoff_fn = cutoff_fn
        self.cutoff = None if cutoff_fn is None else getattr(cutoff_fn, "cutoff", None)
        self.activation = activation

        if nuclear_embedding is None:
            # Deterministic synthetic init for nn.Embedding(100, n_atom_basis): N(0, 1).
            key = jax.random.PRNGKey(0)
            nuclear_embedding = jax.random.normal(key, (VOCAB, n_atom_basis), jnp.float32)
        self.embedding_table = nuclear_embedding

        # Hoisted one-time padding: vocab -> 128 rows (zero rows never selected).
        # Feature dim intentionally left unpadded (no output write amplification).
        # TODO(synk): store the table in bf16 if downstream interact() tolerates it
        # (halves output bytes; this kernel is output-write bound).
        self._table_padded = (
            jnp.zeros((VOCAB_PAD, n_atom_basis), jnp.float32)
            .at[:VOCAB, :]
            .set(jnp.asarray(nuclear_embedding, jnp.float32))
        )

        if electronic_embeddings is None:
            electronic_embeddings = []
        self.electronic_embeddings = electronic_embeddings  # callables (x, inputs) -> dx

    def embed(self, inputs):
        atomic_numbers = inputs["Z"]
        x = pallas_embedding_lookup(atomic_numbers, self._table_padded)
        # TODO(synk): when electronic embeddings exist, fuse these adds into the kernel
        # epilogue to avoid an extra HBM round-trip of x per embedding.
        for embedding in self.electronic_embeddings:
            x = x + embedding(x, inputs)
        return x

    def interact(self, inputs, x):
        # TODO(synk): abstract in the reference module (raises NotImplementedError).
        return x

    def save(self, inputs, x):
        # TODO(synk): abstract in the reference module (raises NotImplementedError).
        return {"scalar_representation": x}

    def forward(self, inputs):
        x = self.embed(inputs)
        x = self.interact(inputs, x)
        return self.save(inputs, x)


if __name__ == "__main__":
    n_atoms = 8
    n_atom_basis = 32

    key = jax.random.PRNGKey(0)
    kz, _ = jax.random.split(key)
    atomic_numbers = jax.random.randint(kz, (n_atoms,), 1, VOCAB, dtype=jnp.int32)

    model = AtomisticRepresentation(n_atom_basis=n_atom_basis, n_interactions=3)
    inputs = {"Z": atomic_numbers}

    out = model.forward(inputs)
    x = jax.block_until_ready(out["scalar_representation"])

    # Reference check against the plain-JAX embedding lookup (single-block path).
    ref = model.embedding_table[atomic_numbers]
    assert x.shape == (n_atoms, n_atom_basis)
    assert jnp.allclose(x, ref, atol=1e-6), "embedding lookup mismatch"

    # Exercise the multi-tile path with atom padding (530 -> pad 536), a forced
    # 2-tile grid (tm=272) and a ragged last block (536 not a multiple of 272).
    n_atoms_big = 530
    z_big = jax.random.randint(jax.random.PRNGKey(1), (n_atoms_big,), 1, VOCAB,
                               dtype=jnp.int32)
    x_big = jax.block_until_ready(
        pallas_embedding_lookup(z_big, model._table_padded)
    )
    ref_big = model.embedding_table[z_big]
    assert x_big.shape == (n_atoms_big, n_atom_basis)
    assert jnp.allclose(x_big, ref_big, atol=1e-6), "tiled embedding lookup mismatch"

    print("KERNEL_OK")
</pallas_src>

<mosaic_0001>
module attributes {stable_mosaic.version = 11 : i64} {
  func.func @_embed_kernel(%arg0: i32, %arg1: memref<8x1xi32, #tpu.memory_space<vmem>>, %arg2: memref<128x32xf32, #tpu.memory_space<vmem>>, %arg3: memref<8x32xf32, #tpu.memory_space<vmem>>) attributes {dimension_semantics = [#tpu.dimension_semantics<parallel>], iteration_bounds = array<i64: 1>, scalar_prefetch = 0 : i64, scratch_operands = 0 : i64, tpu.core_type = #tpu.core_type<tc>, window_params = [{transform_indices = @transform_0, window_bounds = array<i64: 8, 1>}, {pipeline_mode = #tpu.pipeline_mode<synchronous>, transform_indices = @transform_1, window_bounds = array<i64: 128, 32>}, {transform_indices = @transform_2, window_bounds = array<i64: 8, 32>}]} {
    %c0 = arith.constant 0 : index
    %c0_0 = arith.constant 0 : index
    %0 = vector.load %arg1[%c0, %c0_0] : memref<8x1xi32, #tpu.memory_space<vmem>>, vector<8x1xi32>
    %1 = tpu.iota {dimensions = array<i32: 1>} : vector<1x128xi32>
    %2 = vector.broadcast %0 : vector<8x1xi32> to vector<8x128xi32>
    %3 = vector.broadcast %1 : vector<1x128xi32> to vector<8x128xi32>
    %4 = arith.cmpi eq, %2, %3 : vector<8x128xi32>
    %5 = arith.extui %4 : vector<8x128xi1> to vector<8x128xi32>
    %6 = arith.sitofp %5 : vector<8x128xi32> to vector<8x128xf32>
    %c0_1 = arith.constant 0 : index
    %c0_2 = arith.constant 0 : index
    %7 = vector.load %arg2[%c0_1, %c0_2] : memref<128x32xf32, #tpu.memory_space<vmem>>, vector<128x32xf32>
    %cst = arith.constant dense<0.000000e+00> : vector<8x32xf32>
    %8 = tpu.matmul %6, %7, %cst {dimension_numbers = #tpu.dot_dimension_numbers<[1], [0], [0], [1], [0, 0, 1, 1], [], []>} : vector<8x128xf32>, vector<128x32xf32>, vector<8x32xf32> -> vector<8x32xf32>
    %c0_3 = arith.constant 0 : index
    %c0_4 = arith.constant 0 : index
    %9 = vector.load %arg3[%c0_3, %c0_4] : memref<8x32xf32, #tpu.memory_space<vmem>>, vector<8x32xf32>
    tpu.vector_store %arg3[%c0_3, %c0_4], %8 {strides = array<i32>} : memref<8x32xf32, #tpu.memory_space<vmem>>, vector<8x32xf32>,
    return
  }
  func.func @transform_0(%arg0: i32) -> (i32, i32) {
    %c0_i32 = arith.constant 0 : i32
    %c0_i32_0 = arith.constant 0 : i32
    return %arg0, %c0_i32 : i32, i32
  }
  func.func @transform_1(%arg0: i32) -> (i32, i32) {
    %c0_i32 = arith.constant 0 : i32
    %c0_i32_0 = arith.constant 0 : i32
    %c0_i32_1 = arith.constant 0 : i32
    return %c0_i32, %c0_i32_0 : i32, i32
  }
  func.func @transform_2(%arg0: i32) -> (i32, i32) {
    %c0_i32 = arith.constant 0 : i32
    %c0_i32_0 = arith.constant 0 : i32
    return %arg0, %c0_i32 : i32, i32
  }
}

</mosaic_0001>

<llo_original>
// kernel: tpu_custom_call.1
$region0: #{tpu_custom_call.1}
  #allocation0 [shape = 'u32[]', space=smem, size = 0x4, offset = 0x4, fixed_abs, tag = 'smem constant byte address 0x4 - core index']
  #allocation1 [shape = 'u32[72,128]{1,0:T(1,128)}', space=vmem, size = 0x9000, scoped, tag = 'internal scratch']
  %s0 = inlined_call_operand.vmem [shape: s32[8,1], index: 0, kind: input, shape index: {}]
  %s1 = inlined_call_operand.vmem [shape: f32[128,32], index: 1, kind: input, shape index: {}]
  %s2 = inlined_call_operand.hbm [shape: f32[8,32], index: 2, kind: output, shape index: {}]
  %s3 = sld [smem:[#allocation0]]
  $region18: #{tpu_custom_call.1} parent=0
    _
  %s5 = ssub.s32 1, %s3
  %s6 = scalar_select 0, %s5, %s3
  $region1: #{tpu_custom_call.1} parent=0
    #allocation2 [shape = 'u8[4096]{0}', space=vmem, size = 0x1000, scoped, tag = 'output window, operand 0, single buffered']
    #allocation3 [shape = 's32[1]{0}', space=sflag, size = 0x4, scoped, tag = 'scoped memory for tpu_custom_call.1']
    %7 = vsyncpa [#allocation3], 0
    // Predicated region
    $region2: #{tpu_custom_call.1} parent=1 // pred_check
      _
    $region3: #{tpu_custom_call.1} parent=1 // pred_check_branch
      %9 = sbr.rel (0) target = $region5
    $region4: #{tpu_custom_call.1} parent=1 // pred_region
      _
    $region5: #{tpu_custom_call.1} parent=1 // pred_fallthru
      _
    // Predicated region
    $region6: #{tpu_custom_call.1} parent=1 // pred_check
      _
    $region7: #{tpu_custom_call.1} parent=1 // pred_check_branch
      %11 = sbr.rel (0) target = $region9
    $region8: #{tpu_custom_call.1} parent=1 // pred_region
      _
    $region9: #{tpu_custom_call.1} parent=1 // pred_fallthru
      _
    %v12 = vld [vmem:[%s0] sm:$0xff]
    %v13 = vlaneseq
    %v14 = vand.u32 %v13, 127
    %15 = vset.pattern.permute.xlu0 0
    %16 = vperm.xlu0 %15, %v12
    %v17 = vpop.permute.xlu0 %16
    %vm18 = vcmp.eq.s32.totalorder %v17, %v14
    %v19 = vsel %vm18, 1, 0
    %v20 = vcvt.s32.f32 %v19
    %v21 = vld [vmem:[%s1] sm:$0xff]
    %v22 = vld [vmem:[%s1 + $0x8] sm:$0xff]
    %v23 = vld [vmem:[%s1 + $0x10] sm:$0xff]
    %v24 = vld [vmem:[%s1 + $0x18] sm:$0xff]
    %v25 = vld [vmem:[%s1 + $0x20] sm:$0xff]
    %v26 = vld [vmem:[%s1 + $0x28] sm:$0xff]
    %v27 = vld [vmem:[%s1 + $0x30] sm:$0xff]
    %v28 = vld [vmem:[%s1 + $0x38] sm:$0xff]
    %v29 = vld [vmem:[%s1 + $0x40] sm:$0xff]
    %v30 = vld [vmem:[%s1 + $0x48] sm:$0xff]
    %v31 = vld [vmem:[%s1 + $0x50] sm:$0xff]
    %v32 = vld [vmem:[%s1 + $0x58] sm:$0xff]
    %v33 = vld [vmem:[%s1 + $0x60] sm:$0xff]
    %v34 = vld [vmem:[%s1 + $0x68] sm:$0xff]
    %v35 = vld [vmem:[%s1 + $0x70] sm:$0xff]
    %v36 = vld [vmem:[%s1 + $0x78] sm:$0xff]
    %37 = vmatpush.msra.mxu0 %v36
    %38 = vmatpush.msra.mxu0 %v35
    %39 = vmatpush.msra.mxu0 %v34
    %40 = vmatpush.msra.mxu0 %v33
    %41 = vmatpush.msra.mxu0 %v32
    %42 = vmatpush.msra.mxu0 %v31
    %43 = vmatpush.msra.mxu0 %v30
    %44 = vmatpush.msra.mxu0 %v29
    %45 = vmatpush.msra.mxu0 %v28
    %46 = vmatpush.msra.mxu0 %v27
    %47 = vmatpush.msra.mxu0 %v26
    %48 = vmatpush.msra.mxu0 %v25
    %49 = vmatpush.msra.mxu0 %v24
    %50 = vmatpush.msra.mxu0 %v23
    %51 = vmatpush.msra.mxu0 %v22
    %52 = vmatpush.msra.mxu0 %v21
    %53 = vmatmul.f32.gmra.mxu0 %v20
    %v54 = vpop.f32.mrf.mxu0
    %v55 = vadd.f32 0.0, %v54
    %56 = vdwg.mxu0
    %vm57 = vcmask 261120
    %58 = vst.msk [vmem:[#allocation2] sm:$0xff] %vm57, %v55
    // Predicated region
    $region10: #{tpu_custom_call.1} parent=1 // pred_check
      _
    $region11: #{tpu_custom_call.1} parent=1 // pred_check_branch
      %60 = sbr.rel (0) target = $region13
    $region12: #{tpu_custom_call.1} parent=1 // pred_region
      %62 = vsyncadd [#allocation3], 0
      %s64 = sshll.u32 [#allocation2], 4
      %s65 = int_to_ptr.vmem [resolvable:$true] %s64
      %s66 = sshll.u32 %s2, 4
      %s67 = int_to_ptr.hbm [resolvable:$true] %s66
      %69 = dma.vmem_to_hbm [thread:$0]  %s65, 128, %s67, [#allocation3]
    $region13: #{tpu_custom_call.1} parent=1 // pred_fallthru
      _
    // Predicated region
    $region14: #{tpu_custom_call.1} parent=1 // pred_check
      _
    $region15: #{tpu_custom_call.1} parent=1 // pred_check_branch
      %71 = sbr.rel (0) target = $region17
    $region16: #{tpu_custom_call.1} parent=1 // pred_region
      %73 = dma.done [#allocation3], 128
    $region17: #{tpu_custom_call.1} parent=1 // pred_fallthru
      _
    %74 = vsyncpa [#allocation3], 1

</llo_original>
